<compile_context>
chip_gen: v5e
topology: v5e:2x2
jax: 0.10.0
libtpu: 0.0.40
codegen_flags: <defaults>
</compile_context>

<pallas_src>
from functools import partial

import jax
import jax.numpy as jnp
from jax.experimental import pallas as pl
from jax.experimental.pallas import tpu as pltpu


def _round_up(v, m):
    return (v + m - 1) // m * m


def _pick_tile_n(n, kd_pad, d_pad, o_pad, itemsize,
                 budget_bytes=40 * 1024 * 1024):
    """Largest row tile whose double-buffered streams + resident weights fit the budget."""
    weights = 2 * 4 * (d_pad * o_pad + kd_pad * o_pad)                 # f32 weights (x2 margin)
    per_row = 2 * itemsize * (kd_pad + d_pad) + 2 * itemsize * (2 * o_pad)
    avail = max(budget_bytes - weights, 8 * per_row)
    t = int(avail // per_row)
    t = max(8, min(512, (t // 8) * 8))        # multiple of 8 sublanes, capped at 512 rows
    return min(t, _round_up(n, 8))            # never bigger than the (padded) problem


def mean_agg_kernel(x_ref, neib_ref, wx_ref, wnrep_ref, o_ref, *, o_half):
    # x_ref:     (tile_n, D_pad)
    # neib_ref:  (tile_n, KD_pad)        -- flattened neighbor slab (K*D, lane-padded)
    # wx_ref:    (D_pad, O_pad)          -- Wx^T, zero-padded
    # wnrep_ref: (KD_pad, O_pad)         -- tile(Wn^T / K, K), zero-padded
    # o_ref:     (tile_n, 2*O_pad)
    hx = jnp.dot(x_ref[...], wx_ref[...], preferred_element_type=jnp.float32)
    hn = jnp.dot(neib_ref[...], wnrep_ref[...], preferred_element_type=jnp.float32)
    # combine_fn (= concat on dim 1) without an in-kernel concatenate:
    # two lane-aligned half-stores (o_half is a multiple of 128 -> unmasked vst).
    o_ref[:, :o_half] = jnp.maximum(hx, 0.0).astype(o_ref.dtype)
    o_ref[:, o_half:] = jnp.maximum(hn, 0.0).astype(o_ref.dtype)


def mean_aggregator(x, neibs, w_x, w_neib, *, tile_n=None):
    """x: (N, D); neibs: (N*K, D); w_x, w_neib: (O, D) like nn.Linear.weight."""
    N, D = x.shape
    K = neibs.shape[0] // N
    O = w_x.shape[0]
    dtype = x.dtype
    itemsize = jnp.dtype(dtype).itemsize

    D_pad = _round_up(D, 128)
    O_pad = _round_up(O, 128)
    KD = K * D
    KD_pad = _round_up(KD, 128)

    if tile_n is None:
        tile_n = _pick_tile_n(N, KD_pad, D_pad, O_pad, itemsize)
    N_pad = _round_up(N, tile_n)

    # --- wrapper-side layout prep (one-time, cheap vs. the N*K*D stream) ---
    # x: pad rows to the tile and features to a lane multiple (small stream).
    if N_pad != N or D_pad != D:
        x_p = jnp.pad(x, ((0, N_pad - N), (0, D_pad - D)))
    else:
        x_p = x
    # neighbors: flatten to (N, K*D) -- a free, contiguous reshape -- and pad
    # only the flattened trailing dim (no per-neighbor D padding).
    neibs2 = neibs.reshape(N, KD)
    if N_pad != N or KD_pad != KD:
        neibs2 = jnp.pad(neibs2, ((0, N_pad - N), (0, KD_pad - KD)))

    wx_t = jnp.zeros((D_pad, O_pad), jnp.float32).at[:D, :O].set(
        w_x.T.astype(jnp.float32))
    # Fold the 1/K of the mean into the replicated neighbor weight so that
    # mean_k(neib_k) @ Wn^T == neibs2 @ wn_rep  (padded rows/cols are zero).
    wn_rep = jnp.zeros((KD_pad, O_pad), jnp.float32).at[:KD, :O].set(
        jnp.tile(w_neib.T.astype(jnp.float32) / K, (K, 1)))

    grid = (N_pad // tile_n,)
    out_p = pl.pallas_call(
        partial(mean_agg_kernel, o_half=O_pad),
        out_shape=jax.ShapeDtypeStruct((N_pad, 2 * O_pad), dtype),
        grid_spec=pltpu.PrefetchScalarGridSpec(
            num_scalar_prefetch=0,
            grid=grid,
            in_specs=[
                pl.BlockSpec((tile_n, D_pad), lambda i: (i, 0)),
                pl.BlockSpec((tile_n, KD_pad), lambda i: (i, 0)),
                pl.BlockSpec((D_pad, O_pad), lambda i: (0, 0)),
                pl.BlockSpec((KD_pad, O_pad), lambda i: (0, 0)),
            ],
            out_specs=pl.BlockSpec((tile_n, 2 * O_pad), lambda i: (i, 0)),
        ),
        compiler_params=pltpu.CompilerParams(
            dimension_semantics=("parallel",),
            vmem_limit_bytes=64 * 1024 * 1024,   # explicit: valid on v5e/v6e/v7x
        ),
    )(x_p, neibs2, wx_t, wn_rep)

    # Strip the N / O padding and reassemble the (N, 2*O) concat layout.
    return jnp.concatenate(
        [out_p[:N, :O], out_p[:N, O_pad:O_pad + O]], axis=1)


def reference(x, neibs, w_x, w_neib):
    N, D = x.shape
    agg = neibs.reshape(N, -1, D).mean(axis=1)
    out = jnp.concatenate([x @ w_x.T, agg @ w_neib.T], axis=1)
    return jnp.maximum(out, 0.0)


def _run_case(key, N, K, D, O):
    k1, k2, k3, k4 = jax.random.split(key, 4)
    x = jax.random.normal(k1, (N, D), dtype=jnp.float32)
    neibs = jax.random.normal(k2, (N * K, D), dtype=jnp.float32)
    # Deterministic nn.Linear-like weights, shape (output_dim, input_dim).
    w_x = jax.random.normal(k3, (O, D), dtype=jnp.float32) * 0.1
    w_neib = jax.random.normal(k4, (O, D), dtype=jnp.float32) * 0.1

    out = jax.block_until_ready(mean_aggregator(x, neibs, w_x, w_neib))
    ref = reference(x, neibs, w_x, w_neib)
    assert out.shape == (N, 2 * O)
    assert jnp.allclose(out, ref, atol=2e-4, rtol=2e-4), \
        f"mismatch vs reference for N={N},K={K},D={D},O={O}"


if __name__ == "__main__":
    key = jax.random.PRNGKey(0)
    ka, kb = jax.random.split(key)

    # nodes, neighbors/node, input_dim, output_dim
    _run_case(ka, N=16, K=4, D=32, O=32)    # aligned case (K*D = 128)
    _run_case(kb, N=20, K=3, D=48, O=24)    # ragged case (exercises all pad paths)

    print("KERNEL_OK")
</pallas_src>

<mosaic_0001>
module attributes {stable_mosaic.version = 11 : i64} {
  func.func @mean_agg_kernel(%arg0: i32, %arg1: memref<16x128xf32, #tpu.memory_space<vmem>>, %arg2: memref<16x128xf32, #tpu.memory_space<vmem>>, %arg3: memref<128x128xf32, #tpu.memory_space<vmem>>, %arg4: memref<128x128xf32, #tpu.memory_space<vmem>>, %arg5: memref<16x256xf32, #tpu.memory_space<vmem>>) attributes {dimension_semantics = [#tpu.dimension_semantics<parallel>], iteration_bounds = array<i64: 1>, scalar_prefetch = 0 : i64, scratch_operands = 0 : i64, tpu.core_type = #tpu.core_type<tc>, window_params = [{transform_indices = @transform_0, window_bounds = array<i64: 16, 128>}, {transform_indices = @transform_1, window_bounds = array<i64: 16, 128>}, {pipeline_mode = #tpu.pipeline_mode<synchronous>, transform_indices = @transform_2, window_bounds = array<i64: 128, 128>}, {pipeline_mode = #tpu.pipeline_mode<synchronous>, transform_indices = @transform_3, window_bounds = array<i64: 128, 128>}, {transform_indices = @transform_4, window_bounds = array<i64: 16, 256>}]} {
    %c0 = arith.constant 0 : index
    %c0_0 = arith.constant 0 : index
    %0 = vector.load %arg1[%c0, %c0_0] : memref<16x128xf32, #tpu.memory_space<vmem>>, vector<16x128xf32>
    %c0_1 = arith.constant 0 : index
    %c0_2 = arith.constant 0 : index
    %1 = vector.load %arg3[%c0_1, %c0_2] : memref<128x128xf32, #tpu.memory_space<vmem>>, vector<128x128xf32>
    %cst = arith.constant dense<0.000000e+00> : vector<16x128xf32>
    %2 = tpu.matmul %0, %1, %cst {dimension_numbers = #tpu.dot_dimension_numbers<[1], [0], [0], [1], [0, 0, 1, 1], [], []>} : vector<16x128xf32>, vector<128x128xf32>, vector<16x128xf32> -> vector<16x128xf32>
    %c0_3 = arith.constant 0 : index
    %c0_4 = arith.constant 0 : index
    %3 = vector.load %arg2[%c0_3, %c0_4] : memref<16x128xf32, #tpu.memory_space<vmem>>, vector<16x128xf32>
    %c0_5 = arith.constant 0 : index
    %c0_6 = arith.constant 0 : index
    %4 = vector.load %arg4[%c0_5, %c0_6] : memref<128x128xf32, #tpu.memory_space<vmem>>, vector<128x128xf32>
    %cst_7 = arith.constant dense<0.000000e+00> : vector<16x128xf32>
    %5 = tpu.matmul %3, %4, %cst_7 {dimension_numbers = #tpu.dot_dimension_numbers<[1], [0], [0], [1], [0, 0, 1, 1], [], []>} : vector<16x128xf32>, vector<128x128xf32>, vector<16x128xf32> -> vector<16x128xf32>
    %cst_8 = arith.constant 0.000000e+00 : f32
    %6 = vector.broadcast %cst_8 : f32 to vector<16x128xf32>
    %7 = arith.maximumf %2, %6 : vector<16x128xf32>
    %c0_9 = arith.constant 0 : index
    %c0_10 = arith.constant 0 : index
    %8 = vector.load %arg5[%c0_9, %c0_10] : memref<16x256xf32, #tpu.memory_space<vmem>>, vector<16x128xf32>
    tpu.vector_store %arg5[%c0_9, %c0_10], %7 {strides = array<i32>} : memref<16x256xf32, #tpu.memory_space<vmem>>, vector<16x128xf32>,
    %cst_11 = arith.constant 0.000000e+00 : f32
    %9 = vector.broadcast %cst_11 : f32 to vector<16x128xf32>
    %10 = arith.maximumf %5, %9 : vector<16x128xf32>
    %c0_12 = arith.constant 0 : index
    %c128 = arith.constant 128 : index
    %11 = vector.load %arg5[%c0_12, %c128] : memref<16x256xf32, #tpu.memory_space<vmem>>, vector<16x128xf32>
    tpu.vector_store %arg5[%c0_12, %c128], %10 {strides = array<i32>} : memref<16x256xf32, #tpu.memory_space<vmem>>, vector<16x128xf32>,
    return
  }
  func.func @transform_0(%arg0: i32) -> (i32, i32) {
    %c0_i32 = arith.constant 0 : i32
    %c0_i32_0 = arith.constant 0 : i32
    return %arg0, %c0_i32 : i32, i32
  }
  func.func @transform_1(%arg0: i32) -> (i32, i32) {
    %c0_i32 = arith.constant 0 : i32
    %c0_i32_0 = arith.constant 0 : i32
    return %arg0, %c0_i32 : i32, i32
  }
  func.func @transform_2(%arg0: i32) -> (i32, i32) {
    %c0_i32 = arith.constant 0 : i32
    %c0_i32_0 = arith.constant 0 : i32
    %c0_i32_1 = arith.constant 0 : i32
    return %c0_i32, %c0_i32_0 : i32, i32
  }
  func.func @transform_3(%arg0: i32) -> (i32, i32) {
    %c0_i32 = arith.constant 0 : i32
    %c0_i32_0 = arith.constant 0 : i32
    %c0_i32_1 = arith.constant 0 : i32
    return %c0_i32, %c0_i32_0 : i32, i32
  }
  func.func @transform_4(%arg0: i32) -> (i32, i32) {
    %c0_i32 = arith.constant 0 : i32
    %c0_i32_0 = arith.constant 0 : i32
    return %arg0, %c0_i32 : i32, i32
  }
}

</mosaic_0001>

<llo_original>
// kernel: tpu_custom_call.1
$region0: #{tpu_custom_call.1}
  #allocation0 [shape = 'u32[]', space=smem, size = 0x4, offset = 0x4, fixed_abs, tag = 'smem constant byte address 0x4 - core index']
  #allocation1 [shape = 'u32[72,128]{1,0:T(1,128)}', space=vmem, size = 0x9000, scoped, tag = 'internal scratch']
  %s0 = inlined_call_operand.hbm [shape: f32[16,128], index: 0, kind: input, shape index: {}]
  %s1 = inlined_call_operand.hbm [shape: f32[16,128], index: 1, kind: input, shape index: {}]
  %s2 = inlined_call_operand.hbm [shape: f32[128,128], index: 2, kind: input, shape index: {}]
  %s3 = inlined_call_operand.hbm [shape: f32[128,128], index: 3, kind: input, shape index: {}]
  %s4 = inlined_call_operand.hbm [shape: f32[16,256], index: 4, kind: output, shape index: {}]
  %s5 = sld [smem:[#allocation0]]
  $region42: #{tpu_custom_call.1} parent=0
    _
  %s7 = ssub.s32 1, %s5
  %s8 = scalar_select 0, %s7, %s5
  $region1: #{tpu_custom_call.1} parent=0
    #allocation2 [shape = 'u8[8192]{0}', space=vmem, size = 0x2000, scoped, tag = 'input window, operand 0, single buffered']
    #allocation3 [shape = 's32[1]{0}', space=sflag, size = 0x4, scoped, tag = 'scoped memory for tpu_custom_call.1']
    #allocation4 [shape = 's32[1]{0}', space=sflag, size = 0x4, scoped, tag = 'scoped memory for tpu_custom_call.1']
    #allocation5 [shape = 'u8[8192]{0}', space=vmem, size = 0x2000, scoped, tag = 'input window, operand 1, single buffered']
    #allocation6 [shape = 's32[1]{0}', space=sflag, size = 0x4, scoped, tag = 'scoped memory for tpu_custom_call.1']
    #allocation7 [shape = 'u8[65536]{0}', space=vmem, size = 0x10000, scoped, tag = 'input window, operand 2, single buffered']
    #allocation8 [shape = 'u8[65536]{0}', space=vmem, size = 0x10000, scoped, tag = 'input window, operand 3, single buffered']
    #allocation9 [shape = 's32[1]{0}', space=sflag, size = 0x4, scoped, tag = 'scoped memory for tpu_custom_call.1']
    #allocation10 [shape = 'u8[16384]{0}', space=vmem, size = 0x4000, scoped, tag = 'output window, operand 0, single buffered']
    %9 = vsyncpa [#allocation3], 0
    %10 = vsyncpa [#allocation6], 0
    %11 = vsyncpa [#allocation9], 0
    %12 = vsyncpa [#allocation4], 0
    // Predicated region
    $region2: #{tpu_custom_call.1} parent=1 // pred_check
      _
    $region3: #{tpu_custom_call.1} parent=1 // pred_check_branch
      %14 = sbr.rel (0) target = $region5
    $region4: #{tpu_custom_call.1} parent=1 // pred_region
      %16 = vsyncadd [#allocation3], 0
      %s17 = sshll.u32 %s0, 4
      %s18 = int_to_ptr.hbm [resolvable:$true] %s17
      %s19 = sshll.u32 [#allocation2], 4
      %s20 = int_to_ptr.vmem [resolvable:$true] %s19
      %25 = dma.hbm_to_vmem [thread:$0]  %s18, 256, %s20, [#allocation3], 128, 128, 8
    $region5: #{tpu_custom_call.1} parent=1 // pred_fallthru
      _
    // Predicated region
    $region6: #{tpu_custom_call.1} parent=1 // pred_check
      _
    $region7: #{tpu_custom_call.1} parent=1 // pred_check_branch
      %27 = sbr.rel (0) target = $region9
    $region8: #{tpu_custom_call.1} parent=1 // pred_region
      %29 = vsyncadd [#allocation6], 0
      %s30 = sshll.u32 %s1, 4
      %s31 = int_to_ptr.hbm [resolvable:$true] %s30
      %s32 = sshll.u32 [#allocation5], 4
      %s33 = int_to_ptr.vmem [resolvable:$true] %s32
      %38 = dma.hbm_to_vmem [thread:$0]  %s31, 256, %s33, [#allocation6], 128, 128, 8
    $region9: #{tpu_custom_call.1} parent=1 // pred_fallthru
      _
    // Predicated region
    $region10: #{tpu_custom_call.1} parent=1 // pred_check
      _
    $region11: #{tpu_custom_call.1} parent=1 // pred_check_branch
      %40 = sbr.rel (0) target = $region13
    $region12: #{tpu_custom_call.1} parent=1 // pred_region
      %42 = vsyncadd [#allocation6], 0
      %s43 = sshll.u32 %s2, 4
      %s44 = int_to_ptr.hbm [resolvable:$true] %s43
      %s45 = sshll.u32 [#allocation7], 4
      %s46 = int_to_ptr.vmem [resolvable:$true] %s45
      %51 = dma.hbm_to_vmem [thread:$0]  %s44, 2048, %s46, [#allocation6], 128, 128, 8
    $region13: #{tpu_custom_call.1} parent=1 // pred_fallthru
      _
    // Predicated region
    $region14: #{tpu_custom_call.1} parent=1 // pred_check
      _
    $region15: #{tpu_custom_call.1} parent=1 // pred_check_branch
      %53 = sbr.rel (0) target = $region17
    $region16: #{tpu_custom_call.1} parent=1 // pred_region
      %55 = vsyncadd [#allocation9], 0
      %s56 = sshll.u32 %s3, 4
      %s57 = int_to_ptr.hbm [resolvable:$true] %s56
      %s58 = sshll.u32 [#allocation8], 4
      %s59 = int_to_ptr.vmem [resolvable:$true] %s58
      %64 = dma.hbm_to_vmem [thread:$0]  %s57, 2048, %s59, [#allocation9], 128, 128, 8
    $region17: #{tpu_custom_call.1} parent=1 // pred_fallthru
      _
    // Predicated region
    $region18: #{tpu_custom_call.1} parent=1 // pred_check
      _
    $region19: #{tpu_custom_call.1} parent=1 // pred_check_branch
      %66 = sbr.rel (0) target = $region21
    $region20: #{tpu_custom_call.1} parent=1 // pred_region
      %68 = dma.done [#allocation3], 256
    $region21: #{tpu_custom_call.1} parent=1 // pred_fallthru
      _
    // Predicated region
    $region22: #{tpu_custom_call.1} parent=1 // pred_check
      _
    $region23: #{tpu_custom_call.1} parent=1 // pred_check_branch
      %70 = sbr.rel (0) target = $region25
    $region24: #{tpu_custom_call.1} parent=1 // pred_region
      %72 = dma.done [#allocation6], 256
    $region25: #{tpu_custom_call.1} parent=1 // pred_fallthru
      _
    // Predicated region
    $region26: #{tpu_custom_call.1} parent=1 // pred_check
      _
    $region27: #{tpu_custom_call.1} parent=1 // pred_check_branch
      %74 = sbr.rel (0) target = $region29
    $region28: #{tpu_custom_call.1} parent=1 // pred_region
      %76 = dma.done [#allocation6], 2048
    $region29: #{tpu_custom_call.1} parent=1 // pred_fallthru
      _
    // Predicated region
    $region30: #{tpu_custom_call.1} parent=1 // pred_check
      _
    $region31: #{tpu_custom_call.1} parent=1 // pred_check_branch
      %78 = sbr.rel (0) target = $region33
    $region32: #{tpu_custom_call.1} parent=1 // pred_region
      %80 = dma.done [#allocation9], 2048
    $region33: #{tpu_custom_call.1} parent=1 // pred_fallthru
      _
    %v81 = vld [vmem:[#allocation2] sm:$0xff]
    %v82 = vld [vmem:[#allocation2 + $0x8] sm:$0xff]
    %v83 = vld [vmem:[#allocation7] sm:$0xff]
    %v84 = vld [vmem:[#allocation7 + $0x8] sm:$0xff]
    %v85 = vld [vmem:[#allocation7 + $0x10] sm:$0xff]
    %v86 = vld [vmem:[#allocation7 + $0x18] sm:$0xff]
    %v87 = vld [vmem:[#allocation7 + $0x20] sm:$0xff]
    %v88 = vld [vmem:[#allocation7 + $0x28] sm:$0xff]
    %v89 = vld [vmem:[#allocation7 + $0x30] sm:$0xff]
    %v90 = vld [vmem:[#allocation7 + $0x38] sm:$0xff]
    %v91 = vld [vmem:[#allocation7 + $0x40] sm:$0xff]
    %v92 = vld [vmem:[#allocation7 + $0x48] sm:$0xff]
    %v93 = vld [vmem:[#allocation7 + $0x50] sm:$0xff]
    %v94 = vld [vmem:[#allocation7 + $0x58] sm:$0xff]
    %v95 = vld [vmem:[#allocation7 + $0x60] sm:$0xff]
    %v96 = vld [vmem:[#allocation7 + $0x68] sm:$0xff]
    %v97 = vld [vmem:[#allocation7 + $0x70] sm:$0xff]
    %v98 = vld [vmem:[#allocation7 + $0x78] sm:$0xff]
    %99 = vmatpush.msra.mxu0 %v98
    %100 = vmatpush.msra.mxu0 %v97
    %101 = vmatpush.msra.mxu0 %v96
    %102 = vmatpush.msra.mxu0 %v95
    %103 = vmatpush.msra.mxu0 %v94
    %104 = vmatpush.msra.mxu0 %v93
    %105 = vmatpush.msra.mxu0 %v92
    %106 = vmatpush.msra.mxu0 %v91
    %107 = vmatpush.msra.mxu0 %v90
    %108 = vmatpush.msra.mxu0 %v89
    %109 = vmatpush.msra.mxu0 %v88
    %110 = vmatpush.msra.mxu0 %v87
    %111 = vmatpush.msra.mxu0 %v86
    %112 = vmatpush.msra.mxu0 %v85
    %113 = vmatpush.msra.mxu0 %v84
    %114 = vmatpush.msra.mxu0 %v83
    %115 = vmatmul.f32.gmra.mxu0 %v81
    %v116 = vpop.f32.mrf.mxu0
    %v117 = vadd.f32 0.0, %v116
    %118 = vmatmul.f32.gmra.mxu0 %v82
    %v119 = vpop.f32.mrf.mxu0
    %v120 = vadd.f32 0.0, %v119
    %121 = vdwg.mxu0
    %v122 = vld [vmem:[#allocation5] sm:$0xff]
    %v123 = vld [vmem:[#allocation5 + $0x8] sm:$0xff]
    %v124 = vld [vmem:[#allocation8] sm:$0xff]
    %v125 = vld [vmem:[#allocation8 + $0x8] sm:$0xff]
    %v126 = vld [vmem:[#allocation8 + $0x10] sm:$0xff]
    %v127 = vld [vmem:[#allocation8 + $0x18] sm:$0xff]
    %v128 = vld [vmem:[#allocation8 + $0x20] sm:$0xff]
    %v129 = vld [vmem:[#allocation8 + $0x28] sm:$0xff]
    %v130 = vld [vmem:[#allocation8 + $0x30] sm:$0xff]
    %v131 = vld [vmem:[#allocation8 + $0x38] sm:$0xff]
    %v132 = vld [vmem:[#allocation8 + $0x40] sm:$0xff]
    %v133 = vld [vmem:[#allocation8 + $0x48] sm:$0xff]
    %v134 = vld [vmem:[#allocation8 + $0x50] sm:$0xff]
    %v135 = vld [vmem:[#allocation8 + $0x58] sm:$0xff]
    %v136 = vld [vmem:[#allocation8 + $0x60] sm:$0xff]
    %v137 = vld [vmem:[#allocation8 + $0x68] sm:$0xff]
    %v138 = vld [vmem:[#allocation8 + $0x70] sm:$0xff]
    %v139 = vld [vmem:[#allocation8 + $0x78] sm:$0xff]
    %140 = vmatpush.msra.mxu0 %v139
    %141 = vmatpush.msra.mxu0 %v138
    %142 = vmatpush.msra.mxu0 %v137
    %143 = vmatpush.msra.mxu0 %v136
    %144 = vmatpush.msra.mxu0 %v135
    %145 = vmatpush.msra.mxu0 %v134
    %146 = vmatpush.msra.mxu0 %v133
    %147 = vmatpush.msra.mxu0 %v132
    %148 = vmatpush.msra.mxu0 %v131
    %149 = vmatpush.msra.mxu0 %v130
    %150 = vmatpush.msra.mxu0 %v129
    %151 = vmatpush.msra.mxu0 %v128
    %152 = vmatpush.msra.mxu0 %v127
    %153 = vmatpush.msra.mxu0 %v126
    %154 = vmatpush.msra.mxu0 %v125
    %155 = vmatpush.msra.mxu0 %v124
    %156 = vmatmul.f32.gmra.mxu0 %v122
    %v157 = vpop.f32.mrf.mxu0
    %v158 = vadd.f32 0.0, %v157
    %159 = vmatmul.f32.gmra.mxu0 %v123
    %v160 = vpop.f32.mrf.mxu0
    %v161 = vadd.f32 0.0, %v160
    %162 = vdwg.mxu0
    %v163 = vmax.f32 %v117, 0.0
    %v164 = vmax.f32 %v120, 0.0
    %165 = vst [vmem:[#allocation10] sm:$0xff] %v163
    %166 = vst [vmem:[#allocation10 + $0x10] sm:$0xff] %v164
    %v167 = vmax.f32 %v158, 0.0
    %v168 = vmax.f32 %v161, 0.0
    %169 = vst [vmem:[#allocation10 + $0x8] sm:$0xff] %v167
    %170 = vst [vmem:[#allocation10 + $0x18] sm:$0xff] %v168
    // Predicated region
    $region34: #{tpu_custom_call.1} parent=1 // pred_check
      _
    $region35: #{tpu_custom_call.1} parent=1 // pred_check_branch
      %172 = sbr.rel (0) target = $region37
    $region36: #{tpu_custom_call.1} parent=1 // pred_region
      %174 = vsyncadd [#allocation4], 0
      %s175 = sshll.u32 [#allocation10], 4
      %s176 = int_to_ptr.vmem [resolvable:$true] %s175
      %s177 = sshll.u32 %s4, 4
      %s178 = int_to_ptr.hbm [resolvable:$true] %s177
      %183 = dma.vmem_to_hbm [thread:$0]  %s176, 512, %s178, [#allocation4], 256, 256, 16
    $region37: #{tpu_custom_call.1} parent=1 // pred_fallthru
      _
    // Predicated region
    $region38: #{tpu_custom_call.1} parent=1 // pred_check
      _
    $region39: #{tpu_custom_call.1} parent=1 // pred_check_branch
      %185 = sbr.rel (0) target = $region41
    $region40: #{tpu_custom_call.1} parent=1 // pred_region
      %187 = dma.done [#allocation4], 512
    $region41: #{tpu_custom_call.1} parent=1 // pred_fallthru
      _
    %188 = vsyncpa [#allocation3], 1
    %189 = vsyncpa [#allocation6], 1
    %190 = vsyncpa [#allocation9], 1
    %191 = vsyncpa [#allocation4], 1

</llo_original>
